<compile_context>
chip_gen: v5e
topology: v5e:2x2
jax: 0.10.0
libtpu: 0.0.40
codegen_flags: <defaults>
</compile_context>

<pallas_src>
import functools

import jax
import jax.numpy as jnp
from jax.experimental import pallas as pl
from jax.experimental.pallas import tpu as pltpu

INPUT_DIM = 32
OUTPUT_DIM = 32
NUM_GRIDS = 8
GRID_MIN, GRID_MAX = -2.0, 2.0
DENOM = (GRID_MAX - GRID_MIN) / (NUM_GRIDS - 1)
INV_DENOM = 1.0 / DENOM
BASIS = INPUT_DIM * NUM_GRIDS  # 256


def _round_up(x, m):
    return ((x + m - 1) // m) * m


def _chip_generation():
    """Best-effort TPU generation detection (Python-level, trace-time only)."""
    try:
        kind = jax.devices()[0].device_kind.lower()
    except Exception:
        return "unknown"
    if "v7" in kind:
        return "v7x"
    if "v6" in kind:
        return "v6e"
    if "v5" in kind:
        # v5e ("v5 lite") and v5p both have 128 MiB VMEM and no bf16 EUP path.
        return "v5e"
    return "unknown"


# ----------------------------------------------------------------------------
# Kernel
# ----------------------------------------------------------------------------
def kan_rbf_kernel(x_ref, rep_ref, c_ref, w_ref, b_ref, o_ref, *, bf16_exp):
    # x_ref:   (tm, Din)       bf16 row tile of inputs
    # rep_ref: (Din, Din*G)    bf16 0/1 replicator: rep[d, g*Din+d] = 1
    # c_ref:   (1, Din*G)      f32 flattened centers (lane p = g*Din+d -> c[g])
    # w_ref:   (Din*G, Dout)   bf16 row-permuted weights (row p = g*Din+d -> W[d*G+g])
    # b_ref:   (1, Dout)       f32 bias
    # o_ref:   (tm, Dout)      f32 output tile
    x = x_ref[...]                                                 # (tm, Din) bf16

    # MXU-offloaded lane replication: x_rep[:, g*Din+d] == x[:, d] (exact, 0/1 matrix)
    x_rep = jnp.dot(x, rep_ref[...],
                    preferred_element_type=jnp.float32)            # (tm, Din*G) f32

    diff = (x_rep - c_ref[...]) * INV_DENOM                        # f32 VPU
    arg = -(diff * diff)
    if bf16_exp:
        # v6e/v7x: packed-bf16 EUP exp; result feeds the MXU directly.
        phi = jnp.exp(arg.astype(jnp.bfloat16))                    # (tm, Din*G) bf16
    else:
        # v5e / unknown: no native bf16 EUP -> keep exp in f32, cast for MXU.
        phi = jnp.exp(arg).astype(jnp.bfloat16)

    acc = jnp.dot(phi, w_ref[...],
                  preferred_element_type=jnp.float32)              # (tm, Dout) f32
    o_ref[...] = acc + b_ref[...]


# ----------------------------------------------------------------------------
# One-time parameter layout prep (hoisted out of the per-call path)
# ----------------------------------------------------------------------------
def fasterkan_prepare_params(centers, w, b):
    """centers: (G,); w: (Din*G, Dout) with d-major / g-minor rows; b: (Dout,)."""
    dout = w.shape[1]
    # lane / row index p = g*Din + d
    rep = jnp.tile(jnp.eye(INPUT_DIM, dtype=jnp.bfloat16), (1, NUM_GRIDS))   # (Din, Din*G)
    c_flat = jnp.repeat(centers.astype(jnp.float32), INPUT_DIM)[None, :]     # (1, Din*G)
    w_perm = (w.astype(jnp.float32)
              .reshape(INPUT_DIM, NUM_GRIDS, dout)
              .transpose(1, 0, 2)
              .reshape(BASIS, dout)
              .astype(jnp.bfloat16))                                         # (Din*G, Dout)
    b2 = jnp.reshape(b, (1, dout)).astype(jnp.float32)                       # (1, Dout)
    return {"rep": rep, "c": c_flat, "w": w_perm, "b": b2}


# ----------------------------------------------------------------------------
# Wrapper
# ----------------------------------------------------------------------------
def fasterkan_forward(x, params, *, tm=None):
    """x: (B, S, Din) -> (B, S, Dout)."""
    B, S, Din = x.shape
    assert Din == INPUT_DIM
    Dout = params["w"].shape[1]
    M = B * S

    gen = _chip_generation()
    bf16_exp = gen in ("v6e", "v7x")

    # ---- generation-aware tile-size selection (tail padded, multiple of 8) ----
    M8 = _round_up(M, 8)
    if tm is None:
        if gen == "v7x":
            cap = 4096          # 64 MiB VMEM: keep temporaries + buffers well under budget
        elif gen in ("v5e", "v6e"):
            cap = 8192          # 128 MiB VMEM: amortize the ~0.35us/step grid overhead
        else:
            cap = 2048          # conservative default
        if gen == "v7x" and M8 >= 16:
            # Even number of grid steps (>=2) so both TensorCores get equal work.
            steps = max(2, _round_up(pl.cdiv(M8, cap), 2))
            tm = _round_up(pl.cdiv(M8, steps), 8)
        else:
            # Single-TC chips: one big tile when it fits (no forced split).
            tm = min(cap, M8)
    grid_m = pl.cdiv(M, tm)
    M_pad = grid_m * tm

    x2 = x.reshape(M, Din).astype(jnp.bfloat16)          # bf16 boundary: half the HBM read
    if M_pad != M:
        x2 = jnp.pad(x2, ((0, M_pad - M), (0, 0)))

    # ---- VMEM budget: (tm,256) f32 temporaries (~4-5 KB/row) + 2x-buffered I/O ----
    per_row_bytes = 8192  # generous over-budget per row
    vmem_limit = None
    if gen == "v7x":
        vmem_limit = min(48 << 20, max(32 << 20, tm * per_row_bytes + (4 << 20)))
    elif gen in ("v5e", "v6e"):
        vmem_limit = min(100 << 20, max(32 << 20, tm * per_row_bytes + (4 << 20)))

    cost = pl.CostEstimate(
        flops=2 * M_pad * Din * BASIS          # replicator matmul
              + 2 * M_pad * BASIS * Dout       # basis @ W
              + 3 * M_pad * BASIS,             # elementwise sub/mul/neg
        transcendentals=M_pad * BASIS,
        bytes_accessed=2 * M_pad * Din + 4 * M_pad * Dout
                       + 2 * BASIS * Dout + 2 * Din * BASIS
                       + 4 * BASIS + 4 * Dout,
    )

    kernel = functools.partial(kan_rbf_kernel, bf16_exp=bf16_exp)

    out = pl.pallas_call(
        kernel,
        out_shape=jax.ShapeDtypeStruct((M_pad, Dout), jnp.float32),
        grid_spec=pltpu.PrefetchScalarGridSpec(
            num_scalar_prefetch=0,
            grid=(grid_m,),
            in_specs=[
                pl.BlockSpec((tm, Din), lambda i: (i, 0)),          # x tile
                pl.BlockSpec((Din, BASIS), lambda i: (0, 0)),       # replicator (resident)
                pl.BlockSpec((1, BASIS), lambda i: (0, 0)),         # centers   (resident)
                pl.BlockSpec((BASIS, Dout), lambda i: (0, 0)),      # weights   (resident)
                pl.BlockSpec((1, Dout), lambda i: (0, 0)),          # bias      (resident)
            ],
            out_specs=pl.BlockSpec((tm, Dout), lambda i: (i, 0)),
        ),
        compiler_params=pltpu.CompilerParams(
            dimension_semantics=("parallel",),
            vmem_limit_bytes=vmem_limit,
        ),
        cost_estimate=cost,
    )(x2, params["rep"], params["c"], params["w"], params["b"])
    return out[:M].reshape(B, S, Dout)


# ----------------------------------------------------------------------------
# Pure-f32 reference (original d-major flattening / unpermuted W)
# ----------------------------------------------------------------------------
def fasterkan_reference(x, centers, w, b):
    B, S, Din = x.shape
    x2 = x.reshape(B * S, Din).astype(jnp.float32)
    diff = (x2[:, :, None] - centers[None, None, :]) * INV_DENOM     # (M, Din, G)
    phi = jnp.exp(-(diff * diff)).reshape(B * S, Din * NUM_GRIDS)    # d-major, g-minor
    y = phi @ w + b.reshape(1, -1)
    return y.reshape(B, S, -1)


if __name__ == "__main__":
    key = jax.random.PRNGKey(0)
    kx, kw = jax.random.split(key)

    # Small shapes consistent with a sequence-model block: (batch=2, seq=8, input_dim=32)
    B, S = 2, 8
    x = jax.random.normal(kx, (B, S, INPUT_DIM), dtype=jnp.float32)

    # Deterministic synthetic parameters (no checkpoint load).
    centers = jnp.linspace(GRID_MIN, GRID_MAX, NUM_GRIDS, dtype=jnp.float32)
    w_scale = 1.0 / jnp.sqrt(jnp.float32(INPUT_DIM * NUM_GRIDS))
    w = (jax.random.normal(kw, (INPUT_DIM * NUM_GRIDS, OUTPUT_DIM), dtype=jnp.float32)
         * w_scale)
    b = jnp.zeros((OUTPUT_DIM,), dtype=jnp.float32)

    params = fasterkan_prepare_params(centers, w, b)     # one-time layout prep
    y = fasterkan_forward(x, params)
    y = jax.block_until_ready(y)

    y_ref = fasterkan_reference(x, centers, w, b)
    assert y.shape == (B, S, OUTPUT_DIM)
    # bf16 x at the boundary + bf16 MXU operands (+ bf16 exp on v6e/v7x) bound the
    # accuracy to ~1e-2 relative vs the pure-f32 reference.
    assert jnp.allclose(y, y_ref, atol=3e-2, rtol=3e-2), "mismatch vs reference"

    print("KERNEL_OK")
</pallas_src>

<mosaic_0001>
module attributes {stable_mosaic.version = 11 : i64} {
  func.func @kan_rbf_kernel(%arg0: i32, %arg1: memref<16x32xbf16, #tpu.memory_space<vmem>>, %arg2: memref<32x256xbf16, #tpu.memory_space<vmem>>, %arg3: memref<1x256xf32, #tpu.memory_space<vmem>>, %arg4: memref<256x32xbf16, #tpu.memory_space<vmem>>, %arg5: memref<1x32xf32, #tpu.memory_space<vmem>>, %arg6: memref<16x32xf32, #tpu.memory_space<vmem>>) attributes {dimension_semantics = [#tpu.dimension_semantics<parallel>], iteration_bounds = array<i64: 1>, scalar_prefetch = 0 : i64, scratch_operands = 0 : i64, tpu.core_type = #tpu.core_type<tc>, window_params = [{transform_indices = @transform_0, window_bounds = array<i64: 16, 32>}, {pipeline_mode = #tpu.pipeline_mode<synchronous>, transform_indices = @transform_1, window_bounds = array<i64: 32, 256>}, {pipeline_mode = #tpu.pipeline_mode<synchronous>, transform_indices = @transform_2, window_bounds = array<i64: 1, 256>}, {pipeline_mode = #tpu.pipeline_mode<synchronous>, transform_indices = @transform_3, window_bounds = array<i64: 256, 32>}, {pipeline_mode = #tpu.pipeline_mode<synchronous>, transform_indices = @transform_4, window_bounds = array<i64: 1, 32>}, {transform_indices = @transform_5, window_bounds = array<i64: 16, 32>}]} {
    %c0 = arith.constant 0 : index
    %c0_0 = arith.constant 0 : index
    %0 = vector.load %arg1[%c0, %c0_0] : memref<16x32xbf16, #tpu.memory_space<vmem>>, vector<16x32xbf16>
    %c0_1 = arith.constant 0 : index
    %c0_2 = arith.constant 0 : index
    %1 = vector.load %arg2[%c0_1, %c0_2] : memref<32x256xbf16, #tpu.memory_space<vmem>>, vector<32x256xbf16>
    %cst = arith.constant dense<0.000000e+00> : vector<16x256xf32>
    %2 = tpu.matmul %0, %1, %cst {dimension_numbers = #tpu.dot_dimension_numbers<[1], [0], [0], [1], [0, 0, 1, 1], [], []>} : vector<16x32xbf16>, vector<32x256xbf16>, vector<16x256xf32> -> vector<16x256xf32>
    %c0_3 = arith.constant 0 : index
    %c0_4 = arith.constant 0 : index
    %3 = vector.load %arg3[%c0_3, %c0_4] : memref<1x256xf32, #tpu.memory_space<vmem>>, vector<1x256xf32>
    %4 = vector.broadcast %3 : vector<1x256xf32> to vector<16x256xf32>
    %5 = arith.subf %2, %4 : vector<16x256xf32>
    %cst_5 = arith.constant 1.750000e+00 : f32
    %6 = vector.broadcast %cst_5 : f32 to vector<16x256xf32>
    %7 = arith.mulf %5, %6 : vector<16x256xf32>
    %8 = arith.mulf %7, %7 : vector<16x256xf32>
    %cst_6 = arith.constant 0.000000e+00 : f32
    %9 = vector.broadcast %cst_6 : f32 to vector<16x256xf32>
    %10 = arith.subf %9, %8 : vector<16x256xf32>
    %11 = math.exp %10 : vector<16x256xf32>
    %12 = arith.truncf %11 : vector<16x256xf32> to vector<16x256xbf16>
    %c0_7 = arith.constant 0 : index
    %c0_8 = arith.constant 0 : index
    %13 = vector.load %arg4[%c0_7, %c0_8] : memref<256x32xbf16, #tpu.memory_space<vmem>>, vector<256x32xbf16>
    %cst_9 = arith.constant dense<0.000000e+00> : vector<16x32xf32>
    %14 = tpu.matmul %12, %13, %cst_9 {dimension_numbers = #tpu.dot_dimension_numbers<[1], [0], [0], [1], [0, 0, 1, 1], [], []>} : vector<16x256xbf16>, vector<256x32xbf16>, vector<16x32xf32> -> vector<16x32xf32>
    %c0_10 = arith.constant 0 : index
    %c0_11 = arith.constant 0 : index
    %15 = vector.load %arg5[%c0_10, %c0_11] : memref<1x32xf32, #tpu.memory_space<vmem>>, vector<1x32xf32>
    %16 = vector.broadcast %15 : vector<1x32xf32> to vector<16x32xf32>
    %17 = arith.addf %14, %16 : vector<16x32xf32>
    %c0_12 = arith.constant 0 : index
    %c0_13 = arith.constant 0 : index
    %18 = vector.load %arg6[%c0_12, %c0_13] : memref<16x32xf32, #tpu.memory_space<vmem>>, vector<16x32xf32>
    tpu.vector_store %arg6[%c0_12, %c0_13], %17 {strides = array<i32>} : memref<16x32xf32, #tpu.memory_space<vmem>>, vector<16x32xf32>,
    return
  }
  func.func @transform_0(%arg0: i32) -> (i32, i32) {
    %c0_i32 = arith.constant 0 : i32
    %c0_i32_0 = arith.constant 0 : i32
    return %arg0, %c0_i32 : i32, i32
  }
  func.func @transform_1(%arg0: i32) -> (i32, i32) {
    %c0_i32 = arith.constant 0 : i32
    %c0_i32_0 = arith.constant 0 : i32
    %c0_i32_1 = arith.constant 0 : i32
    return %c0_i32, %c0_i32_0 : i32, i32
  }
  func.func @transform_2(%arg0: i32) -> (i32, i32) {
    %c0_i32 = arith.constant 0 : i32
    %c0_i32_0 = arith.constant 0 : i32
    %c0_i32_1 = arith.constant 0 : i32
    return %c0_i32, %c0_i32_0 : i32, i32
  }
  func.func @transform_3(%arg0: i32) -> (i32, i32) {
    %c0_i32 = arith.constant 0 : i32
    %c0_i32_0 = arith.constant 0 : i32
    %c0_i32_1 = arith.constant 0 : i32
    return %c0_i32, %c0_i32_0 : i32, i32
  }
  func.func @transform_4(%arg0: i32) -> (i32, i32) {
    %c0_i32 = arith.constant 0 : i32
    %c0_i32_0 = arith.constant 0 : i32
    %c0_i32_1 = arith.constant 0 : i32
    return %c0_i32, %c0_i32_0 : i32, i32
  }
  func.func @transform_5(%arg0: i32) -> (i32, i32) {
    %c0_i32 = arith.constant 0 : i32
    %c0_i32_0 = arith.constant 0 : i32
    return %arg0, %c0_i32 : i32, i32
  }
}

</mosaic_0001>

<llo_original>
// kernel: tpu_custom_call.1
$region0: #{tpu_custom_call.1}
  #allocation0 [shape = 'u32[]', space=smem, size = 0x4, offset = 0x4, fixed_abs, tag = 'smem constant byte address 0x4 - core index']
  #allocation1 [shape = 'u32[72,128]{1,0:T(1,128)}', space=vmem, size = 0x9000, scoped, tag = 'internal scratch']
  %s0 = inlined_call_operand.vmem [shape: bf16[16,32], index: 0, kind: input, shape index: {}]
  %s1 = inlined_call_operand.vmem [shape: bf16[32,256], index: 1, kind: input, shape index: {}]
  %s2 = inlined_call_operand.vmem [shape: f32[1,256], index: 2, kind: input, shape index: {}]
  %s3 = inlined_call_operand.vmem [shape: bf16[256,32], index: 3, kind: input, shape index: {}]
  %s4 = inlined_call_operand.vmem [shape: f32[1,32], index: 4, kind: input, shape index: {}]
  %s5 = inlined_call_operand.hbm [shape: f32[16,32], index: 5, kind: output, shape index: {}]
  %s6 = sld [smem:[#allocation0]]
  $region30: #{tpu_custom_call.1} parent=0
    _
  %s8 = ssub.s32 1, %s6
  %s9 = scalar_select 0, %s8, %s6
  $region1: #{tpu_custom_call.1} parent=0
    #allocation2 [shape = 'u8[8192]{0}', space=vmem, size = 0x2000, scoped, tag = 'output window, operand 0, single buffered']
    #allocation3 [shape = 's32[1]{0}', space=sflag, size = 0x4, scoped, tag = 'scoped memory for tpu_custom_call.1']
    %10 = vsyncpa [#allocation3], 0
    // Predicated region
    $region2: #{tpu_custom_call.1} parent=1 // pred_check
      _
    $region3: #{tpu_custom_call.1} parent=1 // pred_check_branch
      %12 = sbr.rel (0) target = $region5
    $region4: #{tpu_custom_call.1} parent=1 // pred_region
      _
    $region5: #{tpu_custom_call.1} parent=1 // pred_fallthru
      _
    // Predicated region
    $region6: #{tpu_custom_call.1} parent=1 // pred_check
      _
    $region7: #{tpu_custom_call.1} parent=1 // pred_check_branch
      %14 = sbr.rel (0) target = $region9
    $region8: #{tpu_custom_call.1} parent=1 // pred_region
      _
    $region9: #{tpu_custom_call.1} parent=1 // pred_fallthru
      _
    // Predicated region
    $region10: #{tpu_custom_call.1} parent=1 // pred_check
      _
    $region11: #{tpu_custom_call.1} parent=1 // pred_check_branch
      %16 = sbr.rel (0) target = $region13
    $region12: #{tpu_custom_call.1} parent=1 // pred_region
      _
    $region13: #{tpu_custom_call.1} parent=1 // pred_fallthru
      _
    // Predicated region
    $region14: #{tpu_custom_call.1} parent=1 // pred_check
      _
    $region15: #{tpu_custom_call.1} parent=1 // pred_check_branch
      %18 = sbr.rel (0) target = $region17
    $region16: #{tpu_custom_call.1} parent=1 // pred_region
      _
    $region17: #{tpu_custom_call.1} parent=1 // pred_fallthru
      _
    // Predicated region
    $region18: #{tpu_custom_call.1} parent=1 // pred_check
      _
    $region19: #{tpu_custom_call.1} parent=1 // pred_check_branch
      %20 = sbr.rel (0) target = $region21
    $region20: #{tpu_custom_call.1} parent=1 // pred_region
      _
    $region21: #{tpu_custom_call.1} parent=1 // pred_fallthru
      _
    %v22 = vld [vmem:[%s0] sm:$0xf]
    %v23 = vld [vmem:[%s0 + $0x4] sm:$0xf]
    %v24 = vld [vmem:[%s1] sm:$0xff]
    %v25 = vld [vmem:[%s1 + $0x8] sm:$0xff]
    %v26 = vld [vmem:[%s1 + $0x10] sm:$0xff]
    %v27 = vld [vmem:[%s1 + $0x18] sm:$0xff]
    %v30 = vunpack.c.l.b16 %v22
    %v31 = vunpack.c.l.b16 %v23
    %v32 = vpack.c.b16 %v31, %v30
    %v37 = vunpack.c.l.b16 %v24
    %v38 = vunpack.c.h.b16 %v24
    %v39 = vunpack.c.l.b16 %v25
    %v40 = vunpack.c.h.b16 %v25
    %v41 = vunpack.c.l.b16 %v26
    %v42 = vunpack.c.h.b16 %v26
    %v43 = vunpack.c.l.b16 %v27
    %v44 = vunpack.c.h.b16 %v27
    %v45 = vpack.c.b16 %v39, %v37
    %v46 = vpack.c.b16 %v40, %v38
    %v47 = vpack.c.b16 %v43, %v41
    %v48 = vpack.c.b16 %v44, %v42
    %vm53 = vcmask 261120
    %v55 = vsel %vm53, %v32, 0
    %57 = vmatpush.bf16.msra.mxu0 0
    %58 = vmatpush.bf16.msra.mxu0 0
    %59 = vmatpush.bf16.msra.mxu0 0
    %60 = vmatpush.bf16.msra.mxu0 0
    %61 = vmatpush.bf16.msra.mxu0 0
    %62 = vmatpush.bf16.msra.mxu0 0
    %63 = vmatpush.bf16.msra.mxu0 %v47
    %64 = vmatpush.bf16.msra.mxu0 %v45
    %65 = vmatmul.bf16.gmra.mxu0 %v55
    %v66 = vpop.f32.mrf.mxu0
    %v67 = vadd.f32 0.0, %v66
    %v68 = vpop.f32.mrf.mxu0
    %v69 = vadd.f32 0.0, %v68
    %70 = vdwg.mxu0
    %71 = vmatpush.bf16.msra.mxu0 0
    %72 = vmatpush.bf16.msra.mxu0 0
    %73 = vmatpush.bf16.msra.mxu0 0
    %74 = vmatpush.bf16.msra.mxu0 0
    %75 = vmatpush.bf16.msra.mxu0 0
    %76 = vmatpush.bf16.msra.mxu0 0
    %77 = vmatpush.bf16.msra.mxu0 %v48
    %78 = vmatpush.bf16.msra.mxu0 %v46
    %79 = vmatmul.bf16.gmra.mxu0 %v55
    %v80 = vpop.f32.mrf.mxu0
    %v81 = vadd.f32 0.0, %v80
    %v82 = vpop.f32.mrf.mxu0
    %v83 = vadd.f32 0.0, %v82
    %84 = vdwg.mxu0
    %v85 = vld [vmem:[%s2] sm:$0x3]
    %v87 = vperm.slane %v85, 0
    %v88 = vperm.slane %v85, 1
    %v91 = vsub.f32 %v67, %v87
    %v92 = vsub.f32 %v81, %v88
    %v93 = vsub.f32 %v69, %v87
    %v94 = vsub.f32 %v83, %v88
    %v95 = vmul.f32 %v91, 1.75
    %v96 = vmul.f32 %v92, 1.75
    %v97 = vmul.f32 %v93, 1.75
    %v98 = vmul.f32 %v94, 1.75
    %v99 = vmul.f32 %v95, %v95
    %v100 = vmul.f32 %v96, %v96
    %v101 = vmul.f32 %v97, %v97
    %v102 = vmul.f32 %v98, %v98
    %v103 = vsub.f32 0.0, %v99
    %v104 = vsub.f32 0.0, %v100
    %v105 = vsub.f32 0.0, %v101
    %v106 = vsub.f32 0.0, %v102
    %v107 = vmul.f32 %v103, 1.442695
    %v108 = vpow.pop %v107
    %v109 = vmul.f32 %v104, 1.442695
    %v110 = vpow.pop %v109
    %v111 = vmul.f32 %v105, 1.442695
    %v112 = vpow.pop %v111
    %v113 = vmul.f32 %v106, 1.442695
    %v114 = vpow.pop %v113
    %v115 = vpack.c.bf16 %v112, %v108
    %v116 = vpack.c.bf16 %v114, %v110
    %v117 = vld [vmem:[%s3] sm:$0xf]
    %v118 = vld [vmem:[%s3 + $0x4] sm:$0xf]
    %v119 = vld [vmem:[%s3 + $0x8] sm:$0xf]
    %v120 = vld [vmem:[%s3 + $0xc] sm:$0xf]
    %v121 = vld [vmem:[%s3 + $0x10] sm:$0xf]
    %v122 = vld [vmem:[%s3 + $0x14] sm:$0xf]
    %v123 = vld [vmem:[%s3 + $0x18] sm:$0xf]
    %v124 = vld [vmem:[%s3 + $0x1c] sm:$0xf]
    %v125 = vld [vmem:[%s3 + $0x20] sm:$0xf]
    %v126 = vld [vmem:[%s3 + $0x24] sm:$0xf]
    %v127 = vld [vmem:[%s3 + $0x28] sm:$0xf]
    %v128 = vld [vmem:[%s3 + $0x2c] sm:$0xf]
    %v129 = vld [vmem:[%s3 + $0x30] sm:$0xf]
    %v130 = vld [vmem:[%s3 + $0x34] sm:$0xf]
    %v131 = vld [vmem:[%s3 + $0x38] sm:$0xf]
    %v132 = vld [vmem:[%s3 + $0x3c] sm:$0xf]
    %v133 = vld [vmem:[%s3 + $0x40] sm:$0xf]
    %v134 = vld [vmem:[%s3 + $0x44] sm:$0xf]
    %v135 = vld [vmem:[%s3 + $0x48] sm:$0xf]
    %v136 = vld [vmem:[%s3 + $0x4c] sm:$0xf]
    %v137 = vld [vmem:[%s3 + $0x50] sm:$0xf]
    %v138 = vld [vmem:[%s3 + $0x54] sm:$0xf]
    %v139 = vld [vmem:[%s3 + $0x58] sm:$0xf]
    %v140 = vld [vmem:[%s3 + $0x5c] sm:$0xf]
    %v141 = vld [vmem:[%s3 + $0x60] sm:$0xf]
    %v142 = vld [vmem:[%s3 + $0x64] sm:$0xf]
    %v143 = vld [vmem:[%s3 + $0x68] sm:$0xf]
    %v144 = vld [vmem:[%s3 + $0x6c] sm:$0xf]
    %v145 = vld [vmem:[%s3 + $0x70] sm:$0xf]
    %v146 = vld [vmem:[%s3 + $0x74] sm:$0xf]
    %v147 = vld [vmem:[%s3 + $0x78] sm:$0xf]
    %v148 = vld [vmem:[%s3 + $0x7c] sm:$0xf]
    %v149 = vld [vmem:[%s4] sm:$0x1]
    %v151 = vperm.slane %v149, 0
    %v185 = vunpack.c.l.b16 %v117
    %v186 = vunpack.c.l.b16 %v118
    %v187 = vunpack.c.l.b16 %v119
    %v188 = vunpack.c.l.b16 %v120
    %v189 = vunpack.c.l.b16 %v121
    %v190 = vunpack.c.l.b16 %v122
    %v191 = vunpack.c.l.b16 %v123
    %v192 = vunpack.c.l.b16 %v124
    %v193 = vunpack.c.l.b16 %v125
    %v194 = vunpack.c.l.b16 %v126
    %v195 = vunpack.c.l.b16 %v127
    %v196 = vunpack.c.l.b16 %v128
    %v197 = vunpack.c.l.b16 %v129
    %v198 = vunpack.c.l.b16 %v130
    %v199 = vunpack.c.l.b16 %v131
    %v200 = vunpack.c.l.b16 %v132
    %v201 = vunpack.c.l.b16 %v133
    %v202 = vunpack.c.l.b16 %v134
    %v203 = vunpack.c.l.b16 %v135
    %v204 = vunpack.c.l.b16 %v136
    %v205 = vunpack.c.l.b16 %v137
    %v206 = vunpack.c.l.b16 %v138
    %v207 = vunpack.c.l.b16 %v139
    %v208 = vunpack.c.l.b16 %v140
    %v209 = vunpack.c.l.b16 %v141
    %v210 = vunpack.c.l.b16 %v142
    %v211 = vunpack.c.l.b16 %v143
    %v212 = vunpack.c.l.b16 %v144
    %v213 = vunpack.c.l.b16 %v145
    %v214 = vunpack.c.l.b16 %v146
    %v215 = vunpack.c.l.b16 %v147
    %v216 = vunpack.c.l.b16 %v148
    %v217 = vpack.c.b16 %v186, %v185
    %v218 = vpack.c.b16 %v188, %v187
    %v219 = vpack.c.b16 %v190, %v189
    %v220 = vpack.c.b16 %v192, %v191
    %v221 = vpack.c.b16 %v194, %v193
    %v222 = vpack.c.b16 %v196, %v195
    %v223 = vpack.c.b16 %v198, %v197
    %v224 = vpack.c.b16 %v200, %v199
    %v225 = vpack.c.b16 %v202, %v201
    %v226 = vpack.c.b16 %v204, %v203
    %v227 = vpack.c.b16 %v206, %v205
    %v228 = vpack.c.b16 %v208, %v207
    %v229 = vpack.c.b16 %v210, %v209
    %v230 = vpack.c.b16 %v212, %v211
    %v231 = vpack.c.b16 %v214, %v213
    %v232 = vpack.c.b16 %v216, %v215
    %249 = vmatpush.bf16.msra.mxu0 %v224
    %250 = vmatpush.bf16.msra.mxu0 %v223
    %251 = vmatpush.bf16.msra.mxu0 %v222
    %252 = vmatpush.bf16.msra.mxu0 %v221
    %253 = vmatpush.bf16.msra.mxu0 %v220
    %254 = vmatpush.bf16.msra.mxu0 %v219
    %255 = vmatpush.bf16.msra.mxu0 %v218
    %256 = vmatpush.bf16.msra.mxu0 %v217
    %257 = vmatmul.bf16.gmra.mxu0 %v115
    %v258 = vpop.f32.mrf.mxu0
    %v259 = vadd.f32 %v151, %v258
    %v260 = vpop.f32.mrf.mxu0
    %v261 = vadd.f32 %v151, %v260
    %262 = vdwg.mxu0
    %263 = vmatpush.bf16.msra.mxu0 %v232
    %264 = vmatpush.bf16.msra.mxu0 %v231
    %265 = vmatpush.bf16.msra.mxu0 %v230
    %266 = vmatpush.bf16.msra.mxu0 %v229
    %267 = vmatpush.bf16.msra.mxu0 %v228
    %268 = vmatpush.bf16.msra.mxu0 %v227
    %269 = vmatpush.bf16.msra.mxu0 %v226
    %270 = vmatpush.bf16.msra.mxu0 %v225
    %271 = vmatmul.bf16.gmra.mxu0 %v116
    %v272 = vpop.f32.mrf.mxu0
    %v273 = vadd.f32 %v259, %v272
    %v274 = vpop.f32.mrf.mxu0
    %v275 = vadd.f32 %v261, %v274
    %276 = vdwg.mxu0
    %277 = vst.msk [vmem:[#allocation2] sm:$0xff] %vm53, %v273
    %278 = vst.msk [vmem:[#allocation2 + $0x8] sm:$0xff] %vm53, %v275
    // Predicated region
    $region22: #{tpu_custom_call.1} parent=1 // pred_check
      _
    $region23: #{tpu_custom_call.1} parent=1 // pred_check_branch
      %280 = sbr.rel (0) target = $region25
    $region24: #{tpu_custom_call.1} parent=1 // pred_region
      %282 = vsyncadd [#allocation3], 0
      %s283 = sshll.u32 [#allocation2], 4
      %s284 = int_to_ptr.vmem [resolvable:$true] %s283
      %s285 = sshll.u32 %s5, 4
      %s286 = int_to_ptr.hbm [resolvable:$true] %s285
      %291 = dma.vmem_to_hbm [thread:$0]  %s284, 256, %s286, [#allocation3], 128, 128, 8
    $region25: #{tpu_custom_call.1} parent=1 // pred_fallthru
      _
    // Predicated region
    $region26: #{tpu_custom_call.1} parent=1 // pred_check
      _
    $region27: #{tpu_custom_call.1} parent=1 // pred_check_branch
      %293 = sbr.rel (0) target = $region29
    $region28: #{tpu_custom_call.1} parent=1 // pred_region
      %295 = dma.done [#allocation3], 256
    $region29: #{tpu_custom_call.1} parent=1 // pred_fallthru
      _
    %296 = vsyncpa [#allocation3], 1

</llo_original>
